<compile_context>
chip_gen: v5e
topology: v5e:2x2
jax: 0.10.0
libtpu: 0.0.40
codegen_flags: <defaults>
</compile_context>

<pallas_src>
import math

import jax
import jax.numpy as jnp
from jax.experimental import pallas as pl
from jax.experimental.pallas import tpu as pltpu

D = 512  # hid_dim of Supervised / ModelAttn


# --------------------------------------------------------------------------- #
# Kernel
# --------------------------------------------------------------------------- #
def _fused_linear_kernel(txt_ref, w_ref, b_ref, out_ref):
    """out = txt @ W_fused + b_fused  (bf16 MXU pass, f32 accumulate).

    W_fused stays bf16 all the way into the MXU; only the (block_b, D)
    activations are cast bf16 in-register (cheap vs. widening the weight).
    Bias add is f32 on the VPU.
    """
    out_ref[...] = (
        jnp.dot(txt_ref[...].astype(jnp.bfloat16), w_ref[...],
                preferred_element_type=jnp.float32)
        + b_ref[...]
    )


# --------------------------------------------------------------------------- #
# Parameters
# --------------------------------------------------------------------------- #
def _linear_params(key, fan_in, fan_out):
    """Deterministic nn.Linear-style init: U(-1/sqrt(fan_in), 1/sqrt(fan_in))."""
    kw, kb = jax.random.split(key)
    bound = 1.0 / math.sqrt(fan_in)
    w = jax.random.uniform(kw, (fan_in, fan_out), jnp.float32, -bound, bound)
    b = jax.random.uniform(kb, (1, fan_out), jnp.float32, -bound, bound)
    return w, b


def make_attn0_params(key):
    kq, kk, kv, ko = jax.random.split(key, 4)
    wq, bq = _linear_params(kq, D, D)
    wk, bk = _linear_params(kk, D, D)
    wv, bv = _linear_params(kv, D, D)
    wo, bo = _linear_params(ko, D, D)
    return dict(wq=wq, bq=bq, wk=wk, bk=bk, wv=wv, bv=bv, wo=wo, bo=bo)


def fuse_attn0_params(p):
    """Fold V and O projections into one linear (done once, on the host).

    Seq-len-1 attention => softmax weight == 1 exactly, so
        Attn0(img, txt, txt) == (txt @ Wv + bv) @ Wo + bo
                             == txt @ (Wv @ Wo) + (bv @ Wo + bo)
    Fused weight stored bf16 (halves HBM traffic, MXU-native), bias kept f32.
    """
    w_fused = (p["wv"] @ p["wo"]).astype(jnp.bfloat16)           # (D, D) bf16
    b_fused = (p["bv"] @ p["wo"] + p["bo"]).astype(jnp.float32)  # (1, D) f32
    return w_fused, b_fused


# --------------------------------------------------------------------------- #
# pallas_call wrappers
# --------------------------------------------------------------------------- #
def _choose_block_b(B):
    """Batch tile for the grid path (None => single VMEM-resident block).

    * >= 256 rows/step so the ~0.35 us per-grid-step overhead stays small.
    * <= 1024 rows (~9 MiB VMEM incl. double-buffered batch blocks).
    * <= B // 2 whenever possible so the 'parallel' batch axis has >= 2 steps
      and both v7x TensorCores participate (no-op on 1-TC v5e/v6e).
    """
    if B < 256:
        return None
    half = (B // 2) // 256 * 256
    return int(min(1024, max(256, half)))


def _grid_call(txt, w_fused, b_fused, B, block_b, cost, single_buffer_params):
    param_kw = dict(pipeline_mode=pl.Buffered(1)) if single_buffer_params else {}
    return pl.pallas_call(
        _fused_linear_kernel,
        out_shape=jax.ShapeDtypeStruct((B, D), jnp.float32),
        grid=(pl.cdiv(B, block_b),),        # ragged last block handled by Pallas
        in_specs=[
            pl.BlockSpec((block_b, D), lambda i: (i, 0)),
            pl.BlockSpec((D, D), lambda i: (0, 0), **param_kw),   # grid-invariant
            pl.BlockSpec((1, D), lambda i: (0, 0), **param_kw),   # grid-invariant
        ],
        out_specs=pl.BlockSpec((block_b, D), lambda i: (i, 0)),
        compiler_params=pltpu.CompilerParams(
            dimension_semantics=("parallel",)),
        cost_estimate=cost,
    )(txt, w_fused, b_fused)


def attn0_pallas(txt, w_fused, b_fused):
    """txt: (B, D) f32 -> (B, D) f32 attention output (== fused linear)."""
    B = txt.shape[0]
    cost = pl.CostEstimate(
        flops=2 * B * D * D,
        transcendentals=0,
        bytes_accessed=(w_fused.size * w_fused.dtype.itemsize
                        + b_fused.size * 4 + txt.size * 4 + B * D * 4),
    )

    block_b = _choose_block_b(B)
    if block_b is not None:
        # Large-batch path: batch tiled, "parallel" lets v7x shard across TCs.
        try:
            return _grid_call(txt, w_fused, b_fused, B, block_b, cost, True)
        except Exception:
            # pipeline_mode=pl.Buffered(1) not supported on this jax version;
            # fall back to default (double-buffered) specs.
            return _grid_call(txt, w_fused, b_fused, B, block_b, cost, False)

    # Tiny-batch path (production B=2): everything is one VMEM-resident block.
    # TODO(synk): in the steady-state B=2 inference loop, keep the 0.5 MiB
    # fused weight resident on-chip across calls (cross-pallas_call VMEM
    # future) or emit plain XLA; per-call weight DMA + launch overhead
    # dominate at this batch size.
    full = lambda shape: pl.BlockSpec(shape, memory_space=pltpu.MemorySpace.VMEM)
    return pl.pallas_call(
        _fused_linear_kernel,
        out_shape=jax.ShapeDtypeStruct((B, D), jnp.float32),
        in_specs=[full((B, D)), full((D, D)), full((1, D))],
        out_specs=full((B, D)),
        cost_estimate=cost,
    )(txt, w_fused, b_fused)


def supervised_forward(img, txt, action, hx, r, fused_params):
    """Mirrors Supervised.forward.

    `Stage1.hx = hx` is pure state bookkeeping; action/hx/r never feed the
    returned Q.  With seq-len-1 attention the query (img) is numerically
    irrelevant (softmax over a single key == 1), so only txt reaches the
    kernel.  Returns env_feature of shape (B, 1, D), matching unsqueeze(dim=1)
    inside get_Q.
    """
    del img, action, hx, r
    w_fused, b_fused = fused_params
    out = attn0_pallas(txt, w_fused, b_fused)   # (B, D)
    return out[:, None, :]                      # (B, 1, D)


# --------------------------------------------------------------------------- #
# Pure-JAX references
# --------------------------------------------------------------------------- #
def _reference_full(img, txt, p):
    """Unfused f32 reference: full Q/K/V/O SDPA path (seq len 1)."""
    q = img @ p["wq"] + p["bq"]
    k = txt @ p["wk"] + p["bk"]
    v = txt @ p["wv"] + p["bv"]
    scores = jnp.sum(q * k, axis=-1, keepdims=True) / math.sqrt(D)
    attn = jax.nn.softmax(scores, axis=-1)      # size-1 axis -> all ones
    ctx = attn * v
    out = ctx @ p["wo"] + p["bo"]
    return out[:, None, :]


def _reference_fused(txt, w_fused, b_fused):
    """Reference of exactly what the kernel computes (bf16 x bf16 MXU, f32 acc)."""
    out = jnp.dot(txt.astype(jnp.bfloat16), w_fused,
                  preferred_element_type=jnp.float32) + b_fused
    return out[:, None, :]


# --------------------------------------------------------------------------- #
# Self-test
# --------------------------------------------------------------------------- #
if __name__ == "__main__":
    key = jax.random.PRNGKey(0)
    k_img, k_txt, k_hx, k_params, k_big = jax.random.split(key, 5)

    B = 2
    # CLIP-style unit-normalized 512-d embeddings for image and text.
    img = jax.random.normal(k_img, (B, D), jnp.float32)
    img = img / jnp.linalg.norm(img, axis=-1, keepdims=True)
    txt = jax.random.normal(k_txt, (B, D), jnp.float32)
    txt = txt / jnp.linalg.norm(txt, axis=-1, keepdims=True)

    action = jnp.zeros((B, D), jnp.float32)             # unused by forward
    hx = jax.random.normal(k_hx, (B, D), jnp.float32)   # unused by forward
    r = jnp.zeros((B, 1), jnp.float32)                  # unused by forward

    params = make_attn0_params(k_params)
    fused = fuse_attn0_params(params)

    # ---- production-shaped call (B=2, single VMEM block path) --------------
    q_out = supervised_forward(img, txt, action, hx, r, fused)
    q_out = jax.block_until_ready(q_out)
    assert q_out.shape == (B, 1, D), q_out.shape

    # 1) Kernel matches its own math (bf16 activations/weight, f32 acc).
    ref_fused = _reference_fused(txt, *fused)
    err1 = float(jnp.max(jnp.abs(q_out - ref_fused)))
    assert jnp.allclose(q_out, ref_fused, atol=1e-4, rtol=1e-4), err1

    # 2) Kernel matches the original unfused f32 attention path; slack covers
    #    bf16 weight + activation quantization and matmul re-association.
    ref_full = _reference_full(img, txt, params)
    err2 = float(jnp.max(jnp.abs(q_out - ref_full)))
    assert jnp.allclose(q_out, ref_full, atol=3e-3, rtol=3e-3), err2

    # ---- batched call: exercises the tiled/ragged 'parallel' grid path -----
    B_big = 640                                   # 3 grid steps of 256, ragged tail
    txt_big = jax.random.normal(k_big, (B_big, D), jnp.float32)
    txt_big = txt_big / jnp.linalg.norm(txt_big, axis=-1, keepdims=True)
    out_big = jax.block_until_ready(attn0_pallas(txt_big, *fused))
    assert out_big.shape == (B_big, D), out_big.shape
    ref_big = _reference_fused(txt_big, *fused)[:, 0, :]
    err3 = float(jnp.max(jnp.abs(out_big - ref_big)))
    assert jnp.allclose(out_big, ref_big, atol=1e-4, rtol=1e-4), err3

    print("KERNEL_OK")
</pallas_src>

<mosaic_0001>
module attributes {stable_mosaic.version = 11 : i64} {
  func.func @_fused_linear_kernel(%arg0: memref<2x512xf32, #tpu.memory_space<vmem>>, %arg1: memref<512x512xbf16, #tpu.memory_space<vmem>>, %arg2: memref<1x512xf32, #tpu.memory_space<vmem>>, %arg3: memref<2x512xf32, #tpu.memory_space<vmem>>) attributes {dimension_semantics = [], scalar_prefetch = 0 : i64, scratch_operands = 0 : i64, tpu.core_type = #tpu.core_type<tc>} {
    %c0 = arith.constant 0 : index
    %c0_0 = arith.constant 0 : index
    %0 = vector.load %arg0[%c0, %c0_0] : memref<2x512xf32, #tpu.memory_space<vmem>>, vector<2x512xf32>
    %1 = arith.truncf %0 : vector<2x512xf32> to vector<2x512xbf16>
    %c0_1 = arith.constant 0 : index
    %c0_2 = arith.constant 0 : index
    %2 = vector.load %arg1[%c0_1, %c0_2] : memref<512x512xbf16, #tpu.memory_space<vmem>>, vector<512x512xbf16>
    %cst = arith.constant dense<0.000000e+00> : vector<2x512xf32>
    %3 = tpu.matmul %1, %2, %cst {dimension_numbers = #tpu.dot_dimension_numbers<[1], [0], [0], [1], [0, 0, 1, 1], [], []>} : vector<2x512xbf16>, vector<512x512xbf16>, vector<2x512xf32> -> vector<2x512xf32>
    %c0_3 = arith.constant 0 : index
    %c0_4 = arith.constant 0 : index
    %4 = vector.load %arg2[%c0_3, %c0_4] : memref<1x512xf32, #tpu.memory_space<vmem>>, vector<1x512xf32>
    %5 = vector.broadcast %4 : vector<1x512xf32> to vector<2x512xf32>
    %6 = arith.addf %3, %5 : vector<2x512xf32>
    %c0_5 = arith.constant 0 : index
    %c0_6 = arith.constant 0 : index
    %7 = vector.load %arg3[%c0_5, %c0_6] : memref<2x512xf32, #tpu.memory_space<vmem>>, vector<2x512xf32>
    tpu.vector_store %arg3[%c0_5, %c0_6], %6 {strides = array<i32>} : memref<2x512xf32, #tpu.memory_space<vmem>>, vector<2x512xf32>,
    return
  }
}

</mosaic_0001>

<llo_original>
// kernel: tpu_custom_call.1
$region0: #{tpu_custom_call.1}
  #allocation0 [shape = 'u32[]', space=smem, size = 0x4, offset = 0x4, fixed_abs, tag = 'smem constant byte address 0x4 - core index']
  #allocation1 [shape = 'u32[72,128]{1,0:T(1,128)}', space=vmem, size = 0x9000, scoped, tag = 'internal scratch']
  %s0 = inlined_call_operand.hbm [shape: f32[2,512], index: 0, kind: input, shape index: {}]
  %s1 = inlined_call_operand.hbm [shape: bf16[512,512], index: 1, kind: input, shape index: {}]
  %s2 = inlined_call_operand.hbm [shape: f32[1,512], index: 2, kind: input, shape index: {}]
  %s3 = inlined_call_operand.hbm [shape: f32[2,512], index: 3, kind: output, shape index: {}]
  %s4 = sld [smem:[#allocation0]]
  $region34: #{tpu_custom_call.1} parent=0
    _
  %s6 = ssub.s32 1, %s4
  %s7 = scalar_select 0, %s6, %s4
  $region1: #{tpu_custom_call.1} parent=0
    #allocation2 [shape = 'u8[4096]{0}', space=vmem, size = 0x1000, scoped, tag = 'input window, operand 0, single buffered']
    #allocation3 [shape = 's32[1]{0}', space=sflag, size = 0x4, scoped, tag = 'scoped memory for tpu_custom_call.1']
    #allocation4 [shape = 's32[1]{0}', space=sflag, size = 0x4, scoped, tag = 'scoped memory for tpu_custom_call.1']
    #allocation5 [shape = 'u8[524288]{0}', space=vmem, size = 0x80000, scoped, tag = 'input window, operand 1, single buffered']
    #allocation6 [shape = 's32[1]{0}', space=sflag, size = 0x4, scoped, tag = 'scoped memory for tpu_custom_call.1']
    #allocation7 [shape = 'u8[2048]{0}', space=vmem, size = 0x800, scoped, tag = 'input window, operand 2, single buffered']
    #allocation8 [shape = 'u8[4096]{0}', space=vmem, size = 0x1000, scoped, tag = 'output window, operand 0, single buffered']
    %8 = vsyncpa [#allocation3], 0
    %9 = vsyncpa [#allocation6], 0
    %10 = vsyncpa [#allocation4], 0
    // Predicated region
    $region2: #{tpu_custom_call.1} parent=1 // pred_check
      _
    $region3: #{tpu_custom_call.1} parent=1 // pred_check_branch
      %12 = sbr.rel (0) target = $region5
    $region4: #{tpu_custom_call.1} parent=1 // pred_region
      %14 = vsyncadd [#allocation3], 0
      %s16 = sshll.u32 %s0, 4
      %s17 = int_to_ptr.hbm [resolvable:$true] %s16
      %s18 = sshll.u32 [#allocation2], 4
      %s19 = int_to_ptr.vmem [resolvable:$true] %s18
      %21 = dma.hbm_to_vmem [thread:$0]  %s17, 128, %s19, [#allocation3]
    $region5: #{tpu_custom_call.1} parent=1 // pred_fallthru
      _
    // Predicated region
    $region6: #{tpu_custom_call.1} parent=1 // pred_check
      _
    $region7: #{tpu_custom_call.1} parent=1 // pred_check_branch
      %23 = sbr.rel (0) target = $region9
    $region8: #{tpu_custom_call.1} parent=1 // pred_region
      %25 = vsyncadd [#allocation6], 0
      %s26 = sshll.u32 %s1, 4
      %s27 = int_to_ptr.hbm [resolvable:$true] %s26
      %s28 = sshll.u32 [#allocation5], 4
      %s29 = int_to_ptr.vmem [resolvable:$true] %s28
      %34 = dma.hbm_to_vmem [thread:$0]  %s27, 16384, %s29, [#allocation6], 256, 256, 16
    $region9: #{tpu_custom_call.1} parent=1 // pred_fallthru
      _
    // Predicated region
    $region10: #{tpu_custom_call.1} parent=1 // pred_check
      _
    $region11: #{tpu_custom_call.1} parent=1 // pred_check_branch
      %36 = sbr.rel (0) target = $region13
    $region12: #{tpu_custom_call.1} parent=1 // pred_region
      %38 = vsyncadd [#allocation6], 0
      %s40 = sshll.u32 %s2, 4
      %s41 = int_to_ptr.hbm [resolvable:$true] %s40
      %s42 = sshll.u32 [#allocation7], 4
      %s43 = int_to_ptr.vmem [resolvable:$true] %s42
      %45 = dma.hbm_to_vmem [thread:$0]  %s41, 64, %s43, [#allocation6]
    $region13: #{tpu_custom_call.1} parent=1 // pred_fallthru
      _
    // Predicated region
    $region14: #{tpu_custom_call.1} parent=1 // pred_check
      _
    $region15: #{tpu_custom_call.1} parent=1 // pred_check_branch
      %47 = sbr.rel (0) target = $region17
    $region16: #{tpu_custom_call.1} parent=1 // pred_region
      %49 = dma.done [#allocation3], 128
    $region17: #{tpu_custom_call.1} parent=1 // pred_fallthru
      _
    // Predicated region
    $region18: #{tpu_custom_call.1} parent=1 // pred_check
      _
    $region19: #{tpu_custom_call.1} parent=1 // pred_check_branch
      %51 = sbr.rel (0) target = $region21
    $region20: #{tpu_custom_call.1} parent=1 // pred_region
      %53 = dma.done [#allocation6], 16384
    $region21: #{tpu_custom_call.1} parent=1 // pred_fallthru
      _
    // Predicated region
    $region22: #{tpu_custom_call.1} parent=1 // pred_check
      _
    $region23: #{tpu_custom_call.1} parent=1 // pred_check_branch
      %55 = sbr.rel (0) target = $region25
    $region24: #{tpu_custom_call.1} parent=1 // pred_region
      %57 = dma.done [#allocation6], 64
    $region25: #{tpu_custom_call.1} parent=1 // pred_fallthru
      _
    %v58 = vld [vmem:[#allocation2] sm:$0xff]
    %60 = vst [vmem:[#allocation1] ss:$4 sm:$0xff] %v58
    %v61 = vld.sshfl [vmem:[#allocation1] sm:$0xff pattern:$0x73625140]
    %v62 = vld.sshfl [vmem:[#allocation1 + $0x8] sm:$0xff pattern:$0x73625140]
    %v63 = vld.sshfl [vmem:[#allocation1 + $0x10] sm:$0xff pattern:$0x73625140]
    %v64 = vld.sshfl [vmem:[#allocation1 + $0x18] sm:$0xff pattern:$0x73625140]
    %v69 = vpack.c.bf16 %v61, %v61
    %v70 = vpack.c.bf16 %v62, %v62
    %v71 = vpack.c.bf16 %v63, %v63
    %v72 = vpack.c.bf16 %v64, %v64
    %v73 = vld [vmem:[#allocation5] sm:$0xff]
    %v74 = vld [vmem:[#allocation5 + $0x8] sm:$0xff]
    %v75 = vld [vmem:[#allocation5 + $0x10] sm:$0xff]
    %v76 = vld [vmem:[#allocation5 + $0x18] sm:$0xff]
    %v77 = vld [vmem:[#allocation5 + $0x20] sm:$0xff]
    %v78 = vld [vmem:[#allocation5 + $0x28] sm:$0xff]
    %v79 = vld [vmem:[#allocation5 + $0x30] sm:$0xff]
    %v80 = vld [vmem:[#allocation5 + $0x38] sm:$0xff]
    %v81 = vld [vmem:[#allocation5 + $0x40] sm:$0xff]
    %v82 = vld [vmem:[#allocation5 + $0x48] sm:$0xff]
    %v83 = vld [vmem:[#allocation5 + $0x50] sm:$0xff]
    %v84 = vld [vmem:[#allocation5 + $0x58] sm:$0xff]
    %v85 = vld [vmem:[#allocation5 + $0x60] sm:$0xff]
    %v86 = vld [vmem:[#allocation5 + $0x68] sm:$0xff]
    %v87 = vld [vmem:[#allocation5 + $0x70] sm:$0xff]
    %v88 = vld [vmem:[#allocation5 + $0x78] sm:$0xff]
    %v89 = vld [vmem:[#allocation5 + $0x80] sm:$0xff]
    %v90 = vld [vmem:[#allocation5 + $0x88] sm:$0xff]
    %v91 = vld [vmem:[#allocation5 + $0x90] sm:$0xff]
    %v92 = vld [vmem:[#allocation5 + $0x98] sm:$0xff]
    %v93 = vld [vmem:[#allocation5 + $0xa0] sm:$0xff]
    %v94 = vld [vmem:[#allocation5 + $0xa8] sm:$0xff]
    %v95 = vld [vmem:[#allocation5 + $0xb0] sm:$0xff]
    %v96 = vld [vmem:[#allocation5 + $0xb8] sm:$0xff]
    %v97 = vld [vmem:[#allocation5 + $0xc0] sm:$0xff]
    %v98 = vld [vmem:[#allocation5 + $0xc8] sm:$0xff]
    %v99 = vld [vmem:[#allocation5 + $0xd0] sm:$0xff]
    %v100 = vld [vmem:[#allocation5 + $0xd8] sm:$0xff]
    %v101 = vld [vmem:[#allocation5 + $0xe0] sm:$0xff]
    %v102 = vld [vmem:[#allocation5 + $0xe8] sm:$0xff]
    %v103 = vld [vmem:[#allocation5 + $0xf0] sm:$0xff]
    %v104 = vld [vmem:[#allocation5 + $0xf8] sm:$0xff]
    %v105 = vld [vmem:[#allocation5 + $0x100] sm:$0xff]
    %v106 = vld [vmem:[#allocation5 + $0x108] sm:$0xff]
    %v107 = vld [vmem:[#allocation5 + $0x110] sm:$0xff]
    %v108 = vld [vmem:[#allocation5 + $0x118] sm:$0xff]
    %v109 = vld [vmem:[#allocation5 + $0x120] sm:$0xff]
    %v110 = vld [vmem:[#allocation5 + $0x128] sm:$0xff]
    %v111 = vld [vmem:[#allocation5 + $0x130] sm:$0xff]
    %v112 = vld [vmem:[#allocation5 + $0x138] sm:$0xff]
    %v113 = vld [vmem:[#allocation5 + $0x140] sm:$0xff]
    %v114 = vld [vmem:[#allocation5 + $0x148] sm:$0xff]
    %v115 = vld [vmem:[#allocation5 + $0x150] sm:$0xff]
    %v116 = vld [vmem:[#allocation5 + $0x158] sm:$0xff]
    %v117 = vld [vmem:[#allocation5 + $0x160] sm:$0xff]
    %v118 = vld [vmem:[#allocation5 + $0x168] sm:$0xff]
    %v119 = vld [vmem:[#allocation5 + $0x170] sm:$0xff]
    %v120 = vld [vmem:[#allocation5 + $0x178] sm:$0xff]
    %v121 = vld [vmem:[#allocation5 + $0x180] sm:$0xff]
    %v122 = vld [vmem:[#allocation5 + $0x188] sm:$0xff]
    %v123 = vld [vmem:[#allocation5 + $0x190] sm:$0xff]
    %v124 = vld [vmem:[#allocation5 + $0x198] sm:$0xff]
    %v125 = vld [vmem:[#allocation5 + $0x1a0] sm:$0xff]
    %v126 = vld [vmem:[#allocation5 + $0x1a8] sm:$0xff]
    %v127 = vld [vmem:[#allocation5 + $0x1b0] sm:$0xff]
    %v128 = vld [vmem:[#allocation5 + $0x1b8] sm:$0xff]
    %v129 = vld [vmem:[#allocation5 + $0x1c0] sm:$0xff]
    %v130 = vld [vmem:[#allocation5 + $0x1c8] sm:$0xff]
    %v131 = vld [vmem:[#allocation5 + $0x1d0] sm:$0xff]
    %v132 = vld [vmem:[#allocation5 + $0x1d8] sm:$0xff]
    %v133 = vld [vmem:[#allocation5 + $0x1e0] sm:$0xff]
    %v134 = vld [vmem:[#allocation5 + $0x1e8] sm:$0xff]
    %v135 = vld [vmem:[#allocation5 + $0x1f0] sm:$0xff]
    %v136 = vld [vmem:[#allocation5 + $0x1f8] sm:$0xff]
    %v137 = vld [vmem:[#allocation5 + $0x200] sm:$0xff]
    %v138 = vld [vmem:[#allocation5 + $0x208] sm:$0xff]
    %v139 = vld [vmem:[#allocation5 + $0x210] sm:$0xff]
    %v140 = vld [vmem:[#allocation5 + $0x218] sm:$0xff]
    %v141 = vld [vmem:[#allocation5 + $0x220] sm:$0xff]
    %v142 = vld [vmem:[#allocation5 + $0x228] sm:$0xff]
    %v143 = vld [vmem:[#allocation5 + $0x230] sm:$0xff]
    %v144 = vld [vmem:[#allocation5 + $0x238] sm:$0xff]
    %v145 = vld [vmem:[#allocation5 + $0x240] sm:$0xff]
    %v146 = vld [vmem:[#allocation5 + $0x248] sm:$0xff]
    %v147 = vld [vmem:[#allocation5 + $0x250] sm:$0xff]
    %v148 = vld [vmem:[#allocation5 + $0x258] sm:$0xff]
    %v149 = vld [vmem:[#allocation5 + $0x260] sm:$0xff]
    %v150 = vld [vmem:[#allocation5 + $0x268] sm:$0xff]
    %v151 = vld [vmem:[#allocation5 + $0x270] sm:$0xff]
    %v152 = vld [vmem:[#allocation5 + $0x278] sm:$0xff]
    %v153 = vld [vmem:[#allocation5 + $0x280] sm:$0xff]
    %v154 = vld [vmem:[#allocation5 + $0x288] sm:$0xff]
    %v155 = vld [vmem:[#allocation5 + $0x290] sm:$0xff]
    %v156 = vld [vmem:[#allocation5 + $0x298] sm:$0xff]
    %v157 = vld [vmem:[#allocation5 + $0x2a0] sm:$0xff]
    %v158 = vld [vmem:[#allocation5 + $0x2a8] sm:$0xff]
    %v159 = vld [vmem:[#allocation5 + $0x2b0] sm:$0xff]
    %v160 = vld [vmem:[#allocation5 + $0x2b8] sm:$0xff]
    %v161 = vld [vmem:[#allocation5 + $0x2c0] sm:$0xff]
    %v162 = vld [vmem:[#allocation5 + $0x2c8] sm:$0xff]
    %v163 = vld [vmem:[#allocation5 + $0x2d0] sm:$0xff]
    %v164 = vld [vmem:[#allocation5 + $0x2d8] sm:$0xff]
    %v165 = vld [vmem:[#allocation5 + $0x2e0] sm:$0xff]
    %v166 = vld [vmem:[#allocation5 + $0x2e8] sm:$0xff]
    %v167 = vld [vmem:[#allocation5 + $0x2f0] sm:$0xff]
    %v168 = vld [vmem:[#allocation5 + $0x2f8] sm:$0xff]
    %v169 = vld [vmem:[#allocation5 + $0x300] sm:$0xff]
    %v170 = vld [vmem:[#allocation5 + $0x308] sm:$0xff]
    %v171 = vld [vmem:[#allocation5 + $0x310] sm:$0xff]
    %v172 = vld [vmem:[#allocation5 + $0x318] sm:$0xff]
    %v173 = vld [vmem:[#allocation5 + $0x320] sm:$0xff]
    %v174 = vld [vmem:[#allocation5 + $0x328] sm:$0xff]
    %v175 = vld [vmem:[#allocation5 + $0x330] sm:$0xff]
    %v176 = vld [vmem:[#allocation5 + $0x338] sm:$0xff]
    %v177 = vld [vmem:[#allocation5 + $0x340] sm:$0xff]
    %v178 = vld [vmem:[#allocation5 + $0x348] sm:$0xff]
    %v179 = vld [vmem:[#allocation5 + $0x350] sm:$0xff]
    %v180 = vld [vmem:[#allocation5 + $0x358] sm:$0xff]
    %v181 = vld [vmem:[#allocation5 + $0x360] sm:$0xff]
    %v182 = vld [vmem:[#allocation5 + $0x368] sm:$0xff]
    %v183 = vld [vmem:[#allocation5 + $0x370] sm:$0xff]
    %v184 = vld [vmem:[#allocation5 + $0x378] sm:$0xff]
    %v185 = vld [vmem:[#allocation5 + $0x380] sm:$0xff]
    %v186 = vld [vmem:[#allocation5 + $0x388] sm:$0xff]
    %v187 = vld [vmem:[#allocation5 + $0x390] sm:$0xff]
    %v188 = vld [vmem:[#allocation5 + $0x398] sm:$0xff]
    %v189 = vld [vmem:[#allocation5 + $0x3a0] sm:$0xff]
    %v190 = vld [vmem:[#allocation5 + $0x3a8] sm:$0xff]
    %v191 = vld [vmem:[#allocation5 + $0x3b0] sm:$0xff]
    %v192 = vld [vmem:[#allocation5 + $0x3b8] sm:$0xff]
    %v193 = vld [vmem:[#allocation5 + $0x3c0] sm:$0xff]
    %v194 = vld [vmem:[#allocation5 + $0x3c8] sm:$0xff]
    %v195 = vld [vmem:[#allocation5 + $0x3d0] sm:$0xff]
    %v196 = vld [vmem:[#allocation5 + $0x3d8] sm:$0xff]
    %v197 = vld [vmem:[#allocation5 + $0x3e0] sm:$0xff]
    %v198 = vld [vmem:[#allocation5 + $0x3e8] sm:$0xff]
    %v199 = vld [vmem:[#allocation5 + $0x3f0] sm:$0xff]
    %v200 = vld [vmem:[#allocation5 + $0x3f8] sm:$0xff]
    %v201 = vld [vmem:[#allocation7] sm:$0xf]
    %v203 = vperm.slane %v201, 0
    %v204 = vperm.slane %v201, 1
    %v205 = vperm.slane %v201, 2
    %v206 = vperm.slane %v201, 3
    %v339 = vunpack.c.l.b16 %v73
    %v340 = vunpack.c.h.b16 %v73
    %v341 = vunpack.c.l.b16 %v74
    %v342 = vunpack.c.h.b16 %v74
    %v343 = vunpack.c.l.b16 %v75
    %v344 = vunpack.c.h.b16 %v75
    %v345 = vunpack.c.l.b16 %v76
    %v346 = vunpack.c.h.b16 %v76
    %v347 = vunpack.c.l.b16 %v77
    %v348 = vunpack.c.h.b16 %v77
    %v349 = vunpack.c.l.b16 %v78
    %v350 = vunpack.c.h.b16 %v78
    %v351 = vunpack.c.l.b16 %v79
    %v352 = vunpack.c.h.b16 %v79
    %v353 = vunpack.c.l.b16 %v80
    %v354 = vunpack.c.h.b16 %v80
    %v355 = vunpack.c.l.b16 %v81
    %v356 = vunpack.c.h.b16 %v81
    %v357 = vunpack.c.l.b16 %v82
    %v358 = vunpack.c.h.b16 %v82
    %v359 = vunpack.c.l.b16 %v83
    %v360 = vunpack.c.h.b16 %v83
    %v361 = vunpack.c.l.b16 %v84
    %v362 = vunpack.c.h.b16 %v84
    %v363 = vunpack.c.l.b16 %v85
    %v364 = vunpack.c.h.b16 %v85
    %v365 = vunpack.c.l.b16 %v86
    %v366 = vunpack.c.h.b16 %v86
    %v367 = vunpack.c.l.b16 %v87
    %v368 = vunpack.c.h.b16 %v87
    %v369 = vunpack.c.l.b16 %v88
    %v370 = vunpack.c.h.b16 %v88
    %v371 = vunpack.c.l.b16 %v89
    %v372 = vunpack.c.h.b16 %v89
    %v373 = vunpack.c.l.b16 %v90
    %v374 = vunpack.c.h.b16 %v90
    %v375 = vunpack.c.l.b16 %v91
    %v376 = vunpack.c.h.b16 %v91
    %v377 = vunpack.c.l.b16 %v92
    %v378 = vunpack.c.h.b16 %v92
    %v379 = vunpack.c.l.b16 %v93
    %v380 = vunpack.c.h.b16 %v93
    %v381 = vunpack.c.l.b16 %v94
    %v382 = vunpack.c.h.b16 %v94
    %v383 = vunpack.c.l.b16 %v95
    %v384 = vunpack.c.h.b16 %v95
    %v385 = vunpack.c.l.b16 %v96
    %v386 = vunpack.c.h.b16 %v96
    %v387 = vunpack.c.l.b16 %v97
    %v388 = vunpack.c.h.b16 %v97
    %v389 = vunpack.c.l.b16 %v98
    %v390 = vunpack.c.h.b16 %v98
    %v391 = vunpack.c.l.b16 %v99
    %v392 = vunpack.c.h.b16 %v99
    %v393 = vunpack.c.l.b16 %v100
    %v394 = vunpack.c.h.b16 %v100
    %v395 = vunpack.c.l.b16 %v101
    %v396 = vunpack.c.h.b16 %v101
    %v397 = vunpack.c.l.b16 %v102
    %v398 = vunpack.c.h.b16 %v102
    %v399 = vunpack.c.l.b16 %v103
    %v400 = vunpack.c.h.b16 %v103
    %v401 = vunpack.c.l.b16 %v104
    %v402 = vunpack.c.h.b16 %v104
    %v403 = vunpack.c.l.b16 %v105
    %v404 = vunpack.c.h.b16 %v105
    %v405 = vunpack.c.l.b16 %v106
    %v406 = vunpack.c.h.b16 %v106
    %v407 = vunpack.c.l.b16 %v107
    %v408 = vunpack.c.h.b16 %v107
    %v409 = vunpack.c.l.b16 %v108
    %v410 = vunpack.c.h.b16 %v108
    %v411 = vunpack.c.l.b16 %v109
    %v412 = vunpack.c.h.b16 %v109
    %v413 = vunpack.c.l.b16 %v110
    %v414 = vunpack.c.h.b16 %v110
    %v415 = vunpack.c.l.b16 %v111
    %v416 = vunpack.c.h.b16 %v111
    %v417 = vunpack.c.l.b16 %v112
    %v418 = vunpack.c.h.b16 %v112
    %v419 = vunpack.c.l.b16 %v113
    %v420 = vunpack.c.h.b16 %v113
    %v421 = vunpack.c.l.b16 %v114
    %v422 = vunpack.c.h.b16 %v114
    %v423 = vunpack.c.l.b16 %v115
    %v424 = vunpack.c.h.b16 %v115
    %v425 = vunpack.c.l.b16 %v116
    %v426 = vunpack.c.h.b16 %v116
    %v427 = vunpack.c.l.b16 %v117
    %v428 = vunpack.c.h.b16 %v117
    %v429 = vunpack.c.l.b16 %v118
    %v430 = vunpack.c.h.b16 %v118
    %v431 = vunpack.c.l.b16 %v119
    %v432 = vunpack.c.h.b16 %v119
    %v433 = vunpack.c.l.b16 %v120
    %v434 = vunpack.c.h.b16 %v120
    %v435 = vunpack.c.l.b16 %v121
    %v436 = vunpack.c.h.b16 %v121
    %v437 = vunpack.c.l.b16 %v122
    %v438 = vunpack.c.h.b16 %v122
    %v439 = vunpack.c.l.b16 %v123
    %v440 = vunpack.c.h.b16 %v123
    %v441 = vunpack.c.l.b16 %v124
    %v442 = vunpack.c.h.b16 %v124
    %v443 = vunpack.c.l.b16 %v125
    %v444 = vunpack.c.h.b16 %v125
    %v445 = vunpack.c.l.b16 %v126
    %v446 = vunpack.c.h.b16 %v126
    %v447 = vunpack.c.l.b16 %v127
    %v448 = vunpack.c.h.b16 %v127
    %v449 = vunpack.c.l.b16 %v128
    %v450 = vunpack.c.h.b16 %v128
    %v451 = vunpack.c.l.b16 %v129
    %v452 = vunpack.c.h.b16 %v129
    %v453 = vunpack.c.l.b16 %v130
    %v454 = vunpack.c.h.b16 %v130
    %v455 = vunpack.c.l.b16 %v131
    %v456 = vunpack.c.h.b16 %v131
    %v457 = vunpack.c.l.b16 %v132
    %v458 = vunpack.c.h.b16 %v132
    %v459 = vunpack.c.l.b16 %v133
    %v460 = vunpack.c.h.b16 %v133
    %v461 = vunpack.c.l.b16 %v134
    %v462 = vunpack.c.h.b16 %v134
    %v463 = vunpack.c.l.b16 %v135
    %v464 = vunpack.c.h.b16 %v135
    %v465 = vunpack.c.l.b16 %v136
    %v466 = vunpack.c.h.b16 %v136
    %v467 = vunpack.c.l.b16 %v137
    %v468 = vunpack.c.h.b16 %v137
    %v469 = vunpack.c.l.b16 %v138
    %v470 = vunpack.c.h.b16 %v138
    %v471 = vunpack.c.l.b16 %v139
    %v472 = vunpack.c.h.b16 %v139
    %v473 = vunpack.c.l.b16 %v140
    %v474 = vunpack.c.h.b16 %v140
    %v475 = vunpack.c.l.b16 %v141
    %v476 = vunpack.c.h.b16 %v141
    %v477 = vunpack.c.l.b16 %v142
    %v478 = vunpack.c.h.b16 %v142
    %v479 = vunpack.c.l.b16 %v143
    %v480 = vunpack.c.h.b16 %v143
    %v481 = vunpack.c.l.b16 %v144
    %v482 = vunpack.c.h.b16 %v144
    %v483 = vunpack.c.l.b16 %v145
    %v484 = vunpack.c.h.b16 %v145
    %v485 = vunpack.c.l.b16 %v146
    %v486 = vunpack.c.h.b16 %v146
    %v487 = vunpack.c.l.b16 %v147
    %v488 = vunpack.c.h.b16 %v147
    %v489 = vunpack.c.l.b16 %v148
    %v490 = vunpack.c.h.b16 %v148
    %v491 = vunpack.c.l.b16 %v149
    %v492 = vunpack.c.h.b16 %v149
    %v493 = vunpack.c.l.b16 %v150
    %v494 = vunpack.c.h.b16 %v150
    %v495 = vunpack.c.l.b16 %v151
    %v496 = vunpack.c.h.b16 %v151
    %v497 = vunpack.c.l.b16 %v152
    %v498 = vunpack.c.h.b16 %v152
    %v499 = vunpack.c.l.b16 %v153
    %v500 = vunpack.c.h.b16 %v153
    %v501 = vunpack.c.l.b16 %v154
    %v502 = vunpack.c.h.b16 %v154
    %v503 = vunpack.c.l.b16 %v155
    %v504 = vunpack.c.h.b16 %v155
    %v505 = vunpack.c.l.b16 %v156
    %v506 = vunpack.c.h.b16 %v156
    %v507 = vunpack.c.l.b16 %v157
    %v508 = vunpack.c.h.b16 %v157
    %v509 = vunpack.c.l.b16 %v158
    %v510 = vunpack.c.h.b16 %v158
    %v511 = vunpack.c.l.b16 %v159
    %v512 = vunpack.c.h.b16 %v159
    %v513 = vunpack.c.l.b16 %v160
    %v514 = vunpack.c.h.b16 %v160
    %v515 = vunpack.c.l.b16 %v161
    %v516 = vunpack.c.h.b16 %v161
    %v517 = vunpack.c.l.b16 %v162
    %v518 = vunpack.c.h.b16 %v162
    %v519 = vunpack.c.l.b16 %v163
    %v520 = vunpack.c.h.b16 %v163
    %v521 = vunpack.c.l.b16 %v164
    %v522 = vunpack.c.h.b16 %v164
    %v523 = vunpack.c.l.b16 %v165
    %v524 = vunpack.c.h.b16 %v165
    %v525 = vunpack.c.l.b16 %v166
    %v526 = vunpack.c.h.b16 %v166
    %v527 = vunpack.c.l.b16 %v167
    %v528 = vunpack.c.h.b16 %v167
    %v529 = vunpack.c.l.b16 %v168
    %v530 = vunpack.c.h.b16 %v168
    %v531 = vunpack.c.l.b16 %v169
    %v532 = vunpack.c.h.b16 %v169
    %v533 = vunpack.c.l.b16 %v170
    %v534 = vunpack.c.h.b16 %v170
    %v535 = vunpack.c.l.b16 %v171
    %v536 = vunpack.c.h.b16 %v171
    %v537 = vunpack.c.l.b16 %v172
    %v538 = vunpack.c.h.b16 %v172
    %v539 = vunpack.c.l.b16 %v173
    %v540 = vunpack.c.h.b16 %v173
    %v541 = vunpack.c.l.b16 %v174
    %v542 = vunpack.c.h.b16 %v174
    %v543 = vunpack.c.l.b16 %v175
    %v544 = vunpack.c.h.b16 %v175
    %v545 = vunpack.c.l.b16 %v176
    %v546 = vunpack.c.h.b16 %v176
    %v547 = vunpack.c.l.b16 %v177
    %v548 = vunpack.c.h.b16 %v177
    %v549 = vunpack.c.l.b16 %v178
    %v550 = vunpack.c.h.b16 %v178
    %v551 = vunpack.c.l.b16 %v179
    %v552 = vunpack.c.h.b16 %v179
    %v553 = vunpack.c.l.b16 %v180
    %v554 = vunpack.c.h.b16 %v180
    %v555 = vunpack.c.l.b16 %v181
    %v556 = vunpack.c.h.b16 %v181
    %v557 = vunpack.c.l.b16 %v182
    %v558 = vunpack.c.h.b16 %v182
    %v559 = vunpack.c.l.b16 %v183
    %v560 = vunpack.c.h.b16 %v183
    %v561 = vunpack.c.l.b16 %v184
    %v562 = vunpack.c.h.b16 %v184
    %v563 = vunpack.c.l.b16 %v185
    %v564 = vunpack.c.h.b16 %v185
    %v565 = vunpack.c.l.b16 %v186
    %v566 = vunpack.c.h.b16 %v186
    %v567 = vunpack.c.l.b16 %v187
    %v568 = vunpack.c.h.b16 %v187
    %v569 = vunpack.c.l.b16 %v188
    %v570 = vunpack.c.h.b16 %v188
    %v571 = vunpack.c.l.b16 %v189
    %v572 = vunpack.c.h.b16 %v189
    %v573 = vunpack.c.l.b16 %v190
    %v574 = vunpack.c.h.b16 %v190
    %v575 = vunpack.c.l.b16 %v191
    %v576 = vunpack.c.h.b16 %v191
    %v577 = vunpack.c.l.b16 %v192
    %v578 = vunpack.c.h.b16 %v192
    %v579 = vunpack.c.l.b16 %v193
    %v580 = vunpack.c.h.b16 %v193
    %v581 = vunpack.c.l.b16 %v194
    %v582 = vunpack.c.h.b16 %v194
    %v583 = vunpack.c.l.b16 %v195
    %v584 = vunpack.c.h.b16 %v195
    %v585 = vunpack.c.l.b16 %v196
    %v586 = vunpack.c.h.b16 %v196
    %v587 = vunpack.c.l.b16 %v197
    %v588 = vunpack.c.h.b16 %v197
    %v589 = vunpack.c.l.b16 %v198
    %v590 = vunpack.c.h.b16 %v198
    %v591 = vunpack.c.l.b16 %v199
    %v592 = vunpack.c.h.b16 %v199
    %v593 = vunpack.c.l.b16 %v200
    %v594 = vunpack.c.h.b16 %v200
    %v595 = vpack.c.b16 %v343, %v339
    %v596 = vpack.c.b16 %v344, %v340
    %v597 = vpack.c.b16 %v345, %v341
    %v598 = vpack.c.b16 %v346, %v342
    %v599 = vpack.c.b16 %v351, %v347
    %v600 = vpack.c.b16 %v352, %v348
    %v601 = vpack.c.b16 %v353, %v349
    %v602 = vpack.c.b16 %v354, %v350
    %v603 = vpack.c.b16 %v359, %v355
    %v604 = vpack.c.b16 %v360, %v356
    %v605 = vpack.c.b16 %v361, %v357
    %v606 = vpack.c.b16 %v362, %v358
    %v607 = vpack.c.b16 %v367, %v363
    %v608 = vpack.c.b16 %v368, %v364
    %v609 = vpack.c.b16 %v369, %v365
    %v610 = vpack.c.b16 %v370, %v366
    %v611 = vpack.c.b16 %v375, %v371
    %v612 = vpack.c.b16 %v376, %v372
    %v613 = vpack.c.b16 %v377, %v373
    %v614 = vpack.c.b16 %v378, %v374
    %v615 = vpack.c.b16 %v383, %v379
    %v616 = vpack.c.b16 %v384, %v380
    %v617 = vpack.c.b16 %v385, %v381
    %v618 = vpack.c.b16 %v386, %v382
    %v619 = vpack.c.b16 %v391, %v387
    %v620 = vpack.c.b16 %v392, %v388
    %v621 = vpack.c.b16 %v393, %v389
    %v622 = vpack.c.b16 %v394, %v390
    %v623 = vpack.c.b16 %v399, %v395
    %v624 = vpack.c.b16 %v400, %v396
    %v625 = vpack.c.b16 %v401, %v397
    %v626 = vpack.c.b16 %v402, %v398
    %v627 = vpack.c.b16 %v407, %v403
    %v628 = vpack.c.b16 %v408, %v404
    %v629 = vpack.c.b16 %v409, %v405
    %v630 = vpack.c.b16 %v410, %v406
    %v631 = vpack.c.b16 %v415, %v411
    %v632 = vpack.c.b16 %v416, %v412
    %v633 = vpack.c.b16 %v417, %v413
    %v634 = vpack.c.b16 %v418, %v414
    %v635 = vpack.c.b16 %v423, %v419
    %v636 = vpack.c.b16 %v424, %v420
    %v637 = vpack.c.b16 %v425, %v421
    %v638 = vpack.c.b16 %v426, %v422
    %v639 = vpack.c.b16 %v431, %v427
    %v640 = vpack.c.b16 %v432, %v428
    %v641 = vpack.c.b16 %v433, %v429
    %v642 = vpack.c.b16 %v434, %v430
    %v643 = vpack.c.b16 %v439, %v435
    %v644 = vpack.c.b16 %v440, %v436
    %v645 = vpack.c.b16 %v441, %v437
    %v646 = vpack.c.b16 %v442, %v438
    %v647 = vpack.c.b16 %v447, %v443
    %v648 = vpack.c.b16 %v448, %v444
    %v649 = vpack.c.b16 %v449, %v445
    %v650 = vpack.c.b16 %v450, %v446
    %v651 = vpack.c.b16 %v455, %v451
    %v652 = vpack.c.b16 %v456, %v452
    %v653 = vpack.c.b16 %v457, %v453
    %v654 = vpack.c.b16 %v458, %v454
    %v655 = vpack.c.b16 %v463, %v459
    %v656 = vpack.c.b16 %v464, %v460
    %v657 = vpack.c.b16 %v465, %v461
    %v658 = vpack.c.b16 %v466, %v462
    %v659 = vpack.c.b16 %v471, %v467
    %v660 = vpack.c.b16 %v472, %v468
    %v661 = vpack.c.b16 %v473, %v469
    %v662 = vpack.c.b16 %v474, %v470
    %v663 = vpack.c.b16 %v479, %v475
    %v664 = vpack.c.b16 %v480, %v476
    %v665 = vpack.c.b16 %v481, %v477
    %v666 = vpack.c.b16 %v482, %v478
    %v667 = vpack.c.b16 %v487, %v483
    %v668 = vpack.c.b16 %v488, %v484
    %v669 = vpack.c.b16 %v489, %v485
    %v670 = vpack.c.b16 %v490, %v486
    %v671 = vpack.c.b16 %v495, %v491
    %v672 = vpack.c.b16 %v496, %v492
    %v673 = vpack.c.b16 %v497, %v493
    %v674 = vpack.c.b16 %v498, %v494
    %v675 = vpack.c.b16 %v503, %v499
    %v676 = vpack.c.b16 %v504, %v500
    %v677 = vpack.c.b16 %v505, %v501
    %v678 = vpack.c.b16 %v506, %v502
    %v679 = vpack.c.b16 %v511, %v507
    %v680 = vpack.c.b16 %v512, %v508
    %v681 = vpack.c.b16 %v513, %v509
    %v682 = vpack.c.b16 %v514, %v510
    %v683 = vpack.c.b16 %v519, %v515
    %v684 = vpack.c.b16 %v520, %v516
    %v685 = vpack.c.b16 %v521, %v517
    %v686 = vpack.c.b16 %v522, %v518
    %v687 = vpack.c.b16 %v527, %v523
    %v688 = vpack.c.b16 %v528, %v524
    %v689 = vpack.c.b16 %v529, %v525
    %v690 = vpack.c.b16 %v530, %v526
    %v691 = vpack.c.b16 %v535, %v531
    %v692 = vpack.c.b16 %v536, %v532
    %v693 = vpack.c.b16 %v537, %v533
    %v694 = vpack.c.b16 %v538, %v534
    %v695 = vpack.c.b16 %v543, %v539
    %v696 = vpack.c.b16 %v544, %v540
    %v697 = vpack.c.b16 %v545, %v541
    %v698 = vpack.c.b16 %v546, %v542
    %v699 = vpack.c.b16 %v551, %v547
    %v700 = vpack.c.b16 %v552, %v548
    %v701 = vpack.c.b16 %v553, %v549
    %v702 = vpack.c.b16 %v554, %v550
    %v703 = vpack.c.b16 %v559, %v555
    %v704 = vpack.c.b16 %v560, %v556
    %v705 = vpack.c.b16 %v561, %v557
    %v706 = vpack.c.b16 %v562, %v558
    %v707 = vpack.c.b16 %v567, %v563
    %v708 = vpack.c.b16 %v568, %v564
    %v709 = vpack.c.b16 %v569, %v565
    %v710 = vpack.c.b16 %v570, %v566
    %v711 = vpack.c.b16 %v575, %v571
    %v712 = vpack.c.b16 %v576, %v572
    %v713 = vpack.c.b16 %v577, %v573
    %v714 = vpack.c.b16 %v578, %v574
    %v715 = vpack.c.b16 %v583, %v579
    %v716 = vpack.c.b16 %v584, %v580
    %v717 = vpack.c.b16 %v585, %v581
    %v718 = vpack.c.b16 %v586, %v582
    %v719 = vpack.c.b16 %v591, %v587
    %v720 = vpack.c.b16 %v592, %v588
    %v721 = vpack.c.b16 %v593, %v589
    %v722 = vpack.c.b16 %v594, %v590
    %851 = vmatpush.bf16.msra.mxu0 %v623
    %852 = vmatpush.bf16.msra.mxu0 %v619
    %853 = vmatpush.bf16.msra.mxu0 %v615
    %854 = vmatpush.bf16.msra.mxu0 %v611
    %855 = vmatpush.bf16.msra.mxu0 %v607
    %856 = vmatpush.bf16.msra.mxu0 %v603
    %857 = vmatpush.bf16.msra.mxu0 %v599
    %858 = vmatpush.bf16.msra.mxu0 %v595
    %859 = vmatmul.bf16.gmra.mxu0 %v69
    %v860 = vpop.f32.mrf.mxu0
    %v861 = vadd.f32 %v203, %v860
    %v862 = vpop.f32.mrf.mxu0
    %863 = vdwg.mxu0
    %864 = vmatpush.bf16.msra.mxu0 %v655
    %865 = vmatpush.bf16.msra.mxu0 %v651
    %866 = vmatpush.bf16.msra.mxu0 %v647
    %867 = vmatpush.bf16.msra.mxu0 %v643
    %868 = vmatpush.bf16.msra.mxu0 %v639
    %869 = vmatpush.bf16.msra.mxu0 %v635
    %870 = vmatpush.bf16.msra.mxu0 %v631
    %871 = vmatpush.bf16.msra.mxu0 %v627
    %872 = vmatmul.bf16.gmra.mxu0 %v70
    %v873 = vpop.f32.mrf.mxu0
    %v874 = vadd.f32 %v861, %v873
    %v875 = vpop.f32.mrf.mxu0
    %876 = vdwg.mxu0
    %877 = vmatpush.bf16.msra.mxu0 %v687
    %878 = vmatpush.bf16.msra.mxu0 %v683
    %879 = vmatpush.bf16.msra.mxu0 %v679
    %880 = vmatpush.bf16.msra.mxu0 %v675
    %881 = vmatpush.bf16.msra.mxu0 %v671
    %882 = vmatpush.bf16.msra.mxu0 %v667
    %883 = vmatpush.bf16.msra.mxu0 %v663
    %884 = vmatpush.bf16.msra.mxu0 %v659
    %885 = vmatmul.bf16.gmra.mxu0 %v71
    %v886 = vpop.f32.mrf.mxu0
    %v887 = vadd.f32 %v874, %v886
    %v888 = vpop.f32.mrf.mxu0
    %889 = vdwg.mxu0
    %890 = vmatpush.bf16.msra.mxu0 %v719
    %891 = vmatpush.bf16.msra.mxu0 %v715
    %892 = vmatpush.bf16.msra.mxu0 %v711
    %893 = vmatpush.bf16.msra.mxu0 %v707
    %894 = vmatpush.bf16.msra.mxu0 %v703
    %895 = vmatpush.bf16.msra.mxu0 %v699
    %896 = vmatpush.bf16.msra.mxu0 %v695
    %897 = vmatpush.bf16.msra.mxu0 %v691
    %898 = vmatmul.bf16.gmra.mxu0 %v72
    %v899 = vpop.f32.mrf.mxu0
    %v900 = vadd.f32 %v887, %v899
    %v901 = vpop.f32.mrf.mxu0
    %902 = vdwg.mxu0
    %903 = vmatpush.bf16.msra.mxu0 %v624
    %904 = vmatpush.bf16.msra.mxu0 %v620
    %905 = vmatpush.bf16.msra.mxu0 %v616
    %906 = vmatpush.bf16.msra.mxu0 %v612
    %907 = vmatpush.bf16.msra.mxu0 %v608
    %908 = vmatpush.bf16.msra.mxu0 %v604
    %909 = vmatpush.bf16.msra.mxu0 %v600
    %910 = vmatpush.bf16.msra.mxu0 %v596
    %911 = vmatmul.bf16.gmra.mxu0 %v69
    %v912 = vpop.f32.mrf.mxu0
    %v913 = vadd.f32 %v204, %v912
    %v914 = vpop.f32.mrf.mxu0
    %915 = vdwg.mxu0
    %916 = vmatpush.bf16.msra.mxu0 %v656
    %917 = vmatpush.bf16.msra.mxu0 %v652
    %918 = vmatpush.bf16.msra.mxu0 %v648
    %919 = vmatpush.bf16.msra.mxu0 %v644
    %920 = vmatpush.bf16.msra.mxu0 %v640
    %921 = vmatpush.bf16.msra.mxu0 %v636
    %922 = vmatpush.bf16.msra.mxu0 %v632
    %923 = vmatpush.bf16.msra.mxu0 %v628
    %924 = vmatmul.bf16.gmra.mxu0 %v70
    %v925 = vpop.f32.mrf.mxu0
    %v926 = vadd.f32 %v913, %v925
    %v927 = vpop.f32.mrf.mxu0
    %928 = vdwg.mxu0
    %929 = vmatpush.bf16.msra.mxu0 %v688
    %930 = vmatpush.bf16.msra.mxu0 %v684
    %931 = vmatpush.bf16.msra.mxu0 %v680
    %932 = vmatpush.bf16.msra.mxu0 %v676
    %933 = vmatpush.bf16.msra.mxu0 %v672
    %934 = vmatpush.bf16.msra.mxu0 %v668
    %935 = vmatpush.bf16.msra.mxu0 %v664
    %936 = vmatpush.bf16.msra.mxu0 %v660
    %937 = vmatmul.bf16.gmra.mxu0 %v71
    %v938 = vpop.f32.mrf.mxu0
    %v939 = vadd.f32 %v926, %v938
    %v940 = vpop.f32.mrf.mxu0
    %941 = vdwg.mxu0
    %942 = vmatpush.bf16.msra.mxu0 %v720
    %943 = vmatpush.bf16.msra.mxu0 %v716
    %944 = vmatpush.bf16.msra.mxu0 %v712
    %945 = vmatpush.bf16.msra.mxu0 %v708
    %946 = vmatpush.bf16.msra.mxu0 %v704
    %947 = vmatpush.bf16.msra.mxu0 %v700
    %948 = vmatpush.bf16.msra.mxu0 %v696
    %949 = vmatpush.bf16.msra.mxu0 %v692
    %950 = vmatmul.bf16.gmra.mxu0 %v72
    %v951 = vpop.f32.mrf.mxu0
    %v952 = vadd.f32 %v939, %v951
    %v953 = vpop.f32.mrf.mxu0
    %954 = vdwg.mxu0
    %955 = vmatpush.bf16.msra.mxu0 %v625
    %956 = vmatpush.bf16.msra.mxu0 %v621
    %957 = vmatpush.bf16.msra.mxu0 %v617
    %958 = vmatpush.bf16.msra.mxu0 %v613
    %959 = vmatpush.bf16.msra.mxu0 %v609
    %960 = vmatpush.bf16.msra.mxu0 %v605
    %961 = vmatpush.bf16.msra.mxu0 %v601
    %962 = vmatpush.bf16.msra.mxu0 %v597
    %963 = vmatmul.bf16.gmra.mxu0 %v69
    %v964 = vpop.f32.mrf.mxu0
    %v965 = vadd.f32 %v205, %v964
    %v966 = vpop.f32.mrf.mxu0
    %967 = vdwg.mxu0
    %968 = vmatpush.bf16.msra.mxu0 %v657
    %969 = vmatpush.bf16.msra.mxu0 %v653
    %970 = vmatpush.bf16.msra.mxu0 %v649
    %971 = vmatpush.bf16.msra.mxu0 %v645
    %972 = vmatpush.bf16.msra.mxu0 %v641
    %973 = vmatpush.bf16.msra.mxu0 %v637
    %974 = vmatpush.bf16.msra.mxu0 %v633
    %975 = vmatpush.bf16.msra.mxu0 %v629
    %976 = vmatmul.bf16.gmra.mxu0 %v70
    %v977 = vpop.f32.mrf.mxu0
    %v978 = vadd.f32 %v965, %v977
    %v979 = vpop.f32.mrf.mxu0
    %980 = vdwg.mxu0
    %981 = vmatpush.bf16.msra.mxu0 %v689
    %982 = vmatpush.bf16.msra.mxu0 %v685
    %983 = vmatpush.bf16.msra.mxu0 %v681
    %984 = vmatpush.bf16.msra.mxu0 %v677
    %985 = vmatpush.bf16.msra.mxu0 %v673
    %986 = vmatpush.bf16.msra.mxu0 %v669
    %987 = vmatpush.bf16.msra.mxu0 %v665
    %988 = vmatpush.bf16.msra.mxu0 %v661
    %989 = vmatmul.bf16.gmra.mxu0 %v71
    %v990 = vpop.f32.mrf.mxu0
    %v991 = vadd.f32 %v978, %v990
    %v992 = vpop.f32.mrf.mxu0
    %993 = vdwg.mxu0
    %994 = vmatpush.bf16.msra.mxu0 %v721
    %995 = vmatpush.bf16.msra.mxu0 %v717
    %996 = vmatpush.bf16.msra.mxu0 %v713
    %997 = vmatpush.bf16.msra.mxu0 %v709
    %998 = vmatpush.bf16.msra.mxu0 %v705
    %999 = vmatpush.bf16.msra.mxu0 %v701
    %1000 = vmatpush.bf16.msra.mxu0 %v697
    %1001 = vmatpush.bf16.msra.mxu0 %v693
    %1002 = vmatmul.bf16.gmra.mxu0 %v72
    %v1003 = vpop.f32.mrf.mxu0
    %v1004 = vadd.f32 %v991, %v1003
    %v1005 = vpop.f32.mrf.mxu0
    %1006 = vdwg.mxu0
    %1007 = vmatpush.bf16.msra.mxu0 %v626
    %1008 = vmatpush.bf16.msra.mxu0 %v622
    %1009 = vmatpush.bf16.msra.mxu0 %v618
    %1010 = vmatpush.bf16.msra.mxu0 %v614
    %1011 = vmatpush.bf16.msra.mxu0 %v610
    %1012 = vmatpush.bf16.msra.mxu0 %v606
    %1013 = vmatpush.bf16.msra.mxu0 %v602
    %1014 = vmatpush.bf16.msra.mxu0 %v598
    %1015 = vmatmul.bf16.gmra.mxu0 %v69
    %v1016 = vpop.f32.mrf.mxu0
    %v1017 = vadd.f32 %v206, %v1016
    %v1018 = vpop.f32.mrf.mxu0
    %1019 = vdwg.mxu0
    %1020 = vmatpush.bf16.msra.mxu0 %v658
    %1021 = vmatpush.bf16.msra.mxu0 %v654
    %1022 = vmatpush.bf16.msra.mxu0 %v650
    %1023 = vmatpush.bf16.msra.mxu0 %v646
    %1024 = vmatpush.bf16.msra.mxu0 %v642
    %1025 = vmatpush.bf16.msra.mxu0 %v638
    %1026 = vmatpush.bf16.msra.mxu0 %v634
    %1027 = vmatpush.bf16.msra.mxu0 %v630
    %1028 = vmatmul.bf16.gmra.mxu0 %v70
    %v1029 = vpop.f32.mrf.mxu0
    %v1030 = vadd.f32 %v1017, %v1029
    %v1031 = vpop.f32.mrf.mxu0
    %1032 = vdwg.mxu0
    %1033 = vmatpush.bf16.msra.mxu0 %v690
    %1034 = vmatpush.bf16.msra.mxu0 %v686
    %1035 = vmatpush.bf16.msra.mxu0 %v682
    %1036 = vmatpush.bf16.msra.mxu0 %v678
    %1037 = vmatpush.bf16.msra.mxu0 %v674
    %1038 = vmatpush.bf16.msra.mxu0 %v670
    %1039 = vmatpush.bf16.msra.mxu0 %v666
    %1040 = vmatpush.bf16.msra.mxu0 %v662
    %1041 = vmatmul.bf16.gmra.mxu0 %v71
    %v1042 = vpop.f32.mrf.mxu0
    %v1043 = vadd.f32 %v1030, %v1042
    %v1044 = vpop.f32.mrf.mxu0
    %1045 = vdwg.mxu0
    %1046 = vmatpush.bf16.msra.mxu0 %v722
    %1047 = vmatpush.bf16.msra.mxu0 %v718
    %1048 = vmatpush.bf16.msra.mxu0 %v714
    %1049 = vmatpush.bf16.msra.mxu0 %v710
    %1050 = vmatpush.bf16.msra.mxu0 %v706
    %1051 = vmatpush.bf16.msra.mxu0 %v702
    %1052 = vmatpush.bf16.msra.mxu0 %v698
    %1053 = vmatpush.bf16.msra.mxu0 %v694
    %1054 = vmatmul.bf16.gmra.mxu0 %v72
    %v1055 = vpop.f32.mrf.mxu0
    %v1056 = vadd.f32 %v1043, %v1055
    %v1057 = vpop.f32.mrf.mxu0
    %1058 = vdwg.mxu0
    %v1063 = vrot.slane %v952, 6
    %v1064 = vrot.slane %v1004, 4
    %v1065 = vrot.slane %v1056, 2
    %vm1066 = vcmask 1041408
    %v1067 = vsel %vm1066, %v900, %v1063
    %vm1068 = vcmask 1045508
    %v1069 = vsel %vm1068, %v1064, %v1065
    %vm1070 = vcmask 1043456
    %v1071 = vsel %vm1070, %v1067, %v1069
    %1073 = vst [vmem:[#allocation8] sm:$0xff] %v1071
    // Predicated region
    $region26: #{tpu_custom_call.1} parent=1 // pred_check
      _
    $region27: #{tpu_custom_call.1} parent=1 // pred_check_branch
      %1075 = sbr.rel (0) target = $region29
    $region28: #{tpu_custom_call.1} parent=1 // pred_region
      %1077 = vsyncadd [#allocation4], 0
      %s1079 = sshll.u32 [#allocation8], 4
      %s1080 = int_to_ptr.vmem [resolvable:$true] %s1079
      %s1081 = sshll.u32 %s3, 4
      %s1082 = int_to_ptr.hbm [resolvable:$true] %s1081
      %1084 = dma.vmem_to_hbm [thread:$0]  %s1080, 128, %s1082, [#allocation4]
    $region29: #{tpu_custom_call.1} parent=1 // pred_fallthru
      _
    // Predicated region
    $region30: #{tpu_custom_call.1} parent=1 // pred_check
      _
    $region31: #{tpu_custom_call.1} parent=1 // pred_check_branch
      %1086 = sbr.rel (0) target = $region33
    $region32: #{tpu_custom_call.1} parent=1 // pred_region
      %1088 = dma.done [#allocation4], 128
    $region33: #{tpu_custom_call.1} parent=1 // pred_fallthru
      _
    %1089 = vsyncpa [#allocation3], 1
    %1090 = vsyncpa [#allocation6], 1
    %1091 = vsyncpa [#allocation4], 1

</llo_original>
